<compile_context>
chip_gen: v7x
topology: tpu7x:2x2x1
jax: 0.10.0
libtpu: 0.0.40
codegen_flags: <defaults>
</compile_context>

<pallas_src>
import functools
import math

import jax
import jax.numpy as jnp
from jax import lax
from jax.experimental import pallas as pl
from jax.experimental.pallas import tpu as pltpu

BN_EPS = 1e-3
VMEM_LIMIT = 32 * 1024 * 1024  # safe on v5e (128 MiB phys), v6e (128), v7x (64)

# EfficientNet-B0 block configuration:
# (expand_ratio, kernel, stride, in_channels, out_channels, repeats, se_ratio)
B0_BLOCKS = [
    (1, 3, 1, 32, 16, 1, 0.25),
    (6, 3, 2, 16, 24, 2, 0.25),
    (6, 5, 2, 24, 40, 2, 0.25),
    (6, 3, 2, 40, 80, 3, 0.25),
    (6, 5, 1, 80, 112, 3, 0.25),
    (6, 5, 2, 112, 192, 4, 0.25),
    (6, 3, 1, 192, 320, 1, 0.25),
]
STEM_C = 32
HEAD_IN = 320
HEAD_C = 1280


def _round_up(v, m):
    return ((v + m - 1) // m) * m


def _row_tiles(m, cap=1024):
    """Pick a row tile: <= cap, multiple of 8, preferring exact divisors (zero padding)."""
    m8 = _round_up(m, 8)
    if m8 <= cap:
        return m8, m8, 1
    for tm in range(cap, 255, -8):          # exact divisor -> no pad rows at all
        if m8 % tm == 0:
            return tm, m8, m8 // tm
    nt = -(-m8 // cap)                      # fallback: minimize padding
    tm = _round_up(-(-m8 // nt), 8)
    return tm, tm * nt, nt


def _cparams(*sem):
    return pltpu.CompilerParams(dimension_semantics=sem, vmem_limit_bytes=VMEM_LIMIT)


def _sigmoid(x):
    # exp on the EUP + approximate EUP reciprocal: keeps the gate off the VALU divide.
    # NOTE: ~1e-3 relative deviation vs an exact sigmoid (acceptable for inference).
    return pl.reciprocal(1.0 + jnp.exp(-x), approx=True)


# --------------------------------------------------------------------------
# Generic tiled matmul (+ folded-BN bias + optional swish) -- stem / expand 1x1
# --------------------------------------------------------------------------
def _matmul_kernel(x_ref, w_ref, b_ref, o_ref, *, act):
    y = jnp.dot(x_ref[...], w_ref[...], preferred_element_type=jnp.float32)
    y = y + b_ref[...]
    if act == "swish":
        y = y * _sigmoid(y)
    o_ref[...] = y.astype(o_ref.dtype)


def matmul_bias_act(x, w, b, act="none", out_dtype=jnp.bfloat16, cap=1024):
    m, kdim = x.shape
    ncol = w.shape[1]
    tm, m_pad, nt = _row_tiles(m, cap)
    if m_pad != m:
        x = jnp.pad(x, ((0, m_pad - m), (0, 0)))
    out = pl.pallas_call(
        functools.partial(_matmul_kernel, act=act),
        grid=(nt,),
        out_shape=jax.ShapeDtypeStruct((m_pad, ncol), out_dtype),
        in_specs=[
            pl.BlockSpec((tm, kdim), lambda i: (i, 0)),
            pl.BlockSpec((kdim, ncol), lambda i: (0, 0)),
            pl.BlockSpec((1, ncol), lambda i: (0, 0)),
        ],
        out_specs=pl.BlockSpec((tm, ncol), lambda i: (i, 0)),
        compiler_params=_cparams("parallel"),
    )(x, w, b.reshape(1, ncol))
    return out[:m] if m_pad != m else out


# --------------------------------------------------------------------------
# Depthwise conv (+ folded BN + swish) + fused global-avg-pool + full SE gate.
# Per-row f32 accumulator (stays in vregs), pool carried through the row loop,
# SE reduce/expand FCs computed exactly once per image in the epilogue.
# --------------------------------------------------------------------------
def _se_scale(pool, inv_hw, srw_ref, srb_ref, sew_ref, seb_ref):
    pooled = (pool * inv_hw).astype(jnp.bfloat16)                       # (1, c)
    s1 = jnp.dot(pooled, srw_ref[...], preferred_element_type=jnp.float32) + srb_ref[...]
    s1 = s1 * _sigmoid(s1)                                              # swish
    s2 = jnp.dot(s1.astype(jnp.bfloat16), sew_ref[...],
                 preferred_element_type=jnp.float32) + seb_ref[...]
    return _sigmoid(s2)                                                 # (1, c) f32


def _dw_s1_kernel(x_ref, w_ref, b_ref, srw_ref, srb_ref, sew_ref, seb_ref,
                  o_ref, sc_ref, xp_ref, *, k, pad_t, pad_l, ho, wo, inv_hw):
    h, wsp, c = x_ref.shape
    # In-kernel zero padding: no extra HBM round trip of the expanded activation.
    xp_ref[...] = jnp.zeros(xp_ref.shape, xp_ref.dtype)
    xp_ref[pad_t:pad_t + h, pad_l:pad_l + wsp, :] = x_ref[...]
    w_all = w_ref[...]           # (k*k, c) f32, hoisted out of the row loop
    bias = b_ref[...]            # (1, c) f32

    def row_body(r, pool):
        acc = jnp.zeros((wo, c), jnp.float32)
        for dh in range(k):
            for dw in range(k):
                tap = xp_ref[r + dh, dw:dw + wo, :]
                acc = acc + tap.astype(jnp.float32) * w_all[dh * k + dw]
        acc = acc + bias
        acc = acc * _sigmoid(acc)                         # swish (f32 VPU + EUP)
        o_ref[r] = acc.astype(o_ref.dtype)
        return pool + jnp.sum(acc, axis=0, keepdims=True)

    pool = lax.fori_loop(0, ho, row_body, jnp.zeros((1, c), jnp.float32))
    sc_ref[...] = _se_scale(pool, inv_hw, srw_ref, srb_ref, sew_ref, seb_ref)


def _dw_s2_kernel(x_ref, w_ref, b_ref, srw_ref, srb_ref, sew_ref, seb_ref,
                  o_ref, sc_ref, *, k, s, ph_h, ho, wo, inv_hw):
    c = o_ref.shape[-1]
    w_all = w_ref[...]
    bias = b_ref[...]

    def row_body(r, pool):
        acc = jnp.zeros((wo, c), jnp.float32)
        for dh in range(k):
            for dw in range(k):
                ph = (dh % s) * s + (dw % s)
                tap = x_ref[ph * ph_h + r + dh // s, dw // s:dw // s + wo, :]
                acc = acc + tap.astype(jnp.float32) * w_all[dh * k + dw]
        acc = acc + bias
        acc = acc * _sigmoid(acc)
        o_ref[r] = acc.astype(o_ref.dtype)
        return pool + jnp.sum(acc, axis=0, keepdims=True)

    pool = lax.fori_loop(0, ho, row_body, jnp.zeros((1, c), jnp.float32))
    sc_ref[...] = _se_scale(pool, inv_hw, srw_ref, srb_ref, sew_ref, seb_ref)


def dwconv_swish_se(x, blk):
    """Depthwise conv (TF-same padding, stride s) + folded BN + swish, plus the global average
    pool of the activated output and the full SE gate, in one pallas_call (grid over batch).
    Returns (activated conv output bf16, SE scale (n, 1, c) f32)."""
    k, s = blk["k"], blk["stride"]
    n, h, wsp, c = x.shape
    ho, wo = -(-h // s), -(-wsp // s)
    cse = blk["se_r_w"].shape[1]
    inv_hw = 1.0 / float(ho * wo)

    se_inputs = [blk["se_r_w"], blk["se_r_b"].reshape(1, cse),
                 blk["se_e_w"], blk["se_e_b"].reshape(1, c)]
    se_specs = [pl.BlockSpec((c, cse), lambda b: (0, 0)),
                pl.BlockSpec((1, cse), lambda b: (0, 0)),
                pl.BlockSpec((cse, c), lambda b: (0, 0)),
                pl.BlockSpec((1, c), lambda b: (0, 0))]
    out_shapes = (jax.ShapeDtypeStruct((n, ho, wo, c), jnp.bfloat16),
                  jax.ShapeDtypeStruct((n, 1, c), jnp.float32))
    out_specs = (pl.BlockSpec((None, ho, wo, c), lambda b: (b, 0, 0, 0)),
                 pl.BlockSpec((None, 1, c), lambda b: (b, 0, 0)))

    if s == 1:
        pad = k - 1
        pad_t = pad // 2
        hp, wp = h + pad, wsp + pad
        return pl.pallas_call(
            functools.partial(_dw_s1_kernel, k=k, pad_t=pad_t, pad_l=pad_t,
                              ho=ho, wo=wo, inv_hw=inv_hw),
            grid=(n,),
            out_shape=out_shapes,
            in_specs=[pl.BlockSpec((None, h, wsp, c), lambda b: (b, 0, 0, 0)),
                      pl.BlockSpec((k * k, c), lambda b: (0, 0)),
                      pl.BlockSpec((1, c), lambda b: (0, 0))] + se_specs,
            out_specs=out_specs,
            scratch_shapes=[pltpu.VMEM((hp, wp, c), jnp.bfloat16)],
            compiler_params=_cparams("parallel"),
        )(x, blk["dw_w"], blk["dw_b"].reshape(1, c), *se_inputs)

    # stride 2: TODO(synk): the space-to-depth (phase split) below is still an XLA-side
    # transpose (one extra HBM round trip of the expanded activation, 4 blocks only);
    # moving it in-kernel needs strided ref loads or halo DMA.
    hp_req = (ho - 1) * s + k
    wp_req = (wo - 1) * s + k
    ph_tot, pw_tot = hp_req - h, wp_req - wsp
    pad_t, pad_b = ph_tot // 2, ph_tot - ph_tot // 2
    pad_l, pad_r = pw_tot // 2, pw_tot - pw_tot // 2
    hp2 = s * ((k - 1) // s + ho)
    wp2 = s * ((k - 1) // s + wo)
    pad_b += hp2 - hp_req
    pad_r += wp2 - wp_req
    xp = jnp.pad(x, ((0, 0), (pad_t, pad_b), (pad_l, pad_r), (0, 0)))
    ph_h, ph_w = hp2 // s, wp2 // s
    xp = xp.reshape(n, ph_h, s, ph_w, s, c).transpose(0, 2, 4, 1, 3, 5)
    xp = xp.reshape(n, s * s * ph_h, ph_w, c)   # phase-major, phase & row merged -> one leading index
    return pl.pallas_call(
        functools.partial(_dw_s2_kernel, k=k, s=s, ph_h=ph_h, ho=ho, wo=wo, inv_hw=inv_hw),
        grid=(n,),
        out_shape=out_shapes,
        in_specs=[pl.BlockSpec((None, s * s * ph_h, ph_w, c), lambda b: (b, 0, 0, 0)),
                  pl.BlockSpec((k * k, c), lambda b: (0, 0)),
                  pl.BlockSpec((1, c), lambda b: (0, 0))] + se_specs,
        out_specs=out_specs,
        compiler_params=_cparams("parallel"),
    )(xp, blk["dw_w"], blk["dw_b"].reshape(1, c), *se_inputs)


# --------------------------------------------------------------------------
# SE rescale + project 1x1 conv (+ folded BN) + optional residual add.
# The SE scale was already computed once per image by the depthwise kernel.
# --------------------------------------------------------------------------
def _se_proj_kernel(*refs, has_res):
    if has_res:
        x_ref, sc_ref, pw_ref, pb_ref, r_ref, o_ref = refs
    else:
        x_ref, sc_ref, pw_ref, pb_ref, o_ref = refs
        r_ref = None
    scale = sc_ref[...]                                            # (1, ce) f32
    xs = (x_ref[...].astype(jnp.float32) * scale).astype(jnp.bfloat16)
    y = jnp.dot(xs, pw_ref[...], preferred_element_type=jnp.float32) + pb_ref[...]
    if has_res:
        y = y + r_ref[...].astype(jnp.float32)
    o_ref[...] = y.astype(o_ref.dtype)


def se_project(x, scale, blk, residual=None):
    n, ho, wo, ce = x.shape
    hw = ho * wo
    co = blk["proj_w"].shape[1]
    tm, hw_pad, nt = _row_tiles(hw, cap=1024)
    x2 = x.reshape(n, hw, ce)
    if hw_pad != hw:
        x2 = jnp.pad(x2, ((0, 0), (0, hw_pad - hw), (0, 0)))
    inputs = [x2, scale, blk["proj_w"], blk["proj_b"].reshape(1, co)]
    in_specs = [
        pl.BlockSpec((None, tm, ce), lambda b, m: (b, m, 0)),
        pl.BlockSpec((None, 1, ce), lambda b, m: (b, 0, 0)),
        pl.BlockSpec((ce, co), lambda b, m: (0, 0)),
        pl.BlockSpec((1, co), lambda b, m: (0, 0)),
    ]
    has_res = residual is not None
    if has_res:
        r2 = residual.reshape(n, hw, co)
        if hw_pad != hw:
            r2 = jnp.pad(r2, ((0, 0), (0, hw_pad - hw), (0, 0)))
        inputs.append(r2)
        in_specs.append(pl.BlockSpec((None, tm, co), lambda b, m: (b, m, 0)))
    out = pl.pallas_call(
        functools.partial(_se_proj_kernel, has_res=has_res),
        grid=(n, nt),
        out_shape=jax.ShapeDtypeStruct((n, hw_pad, co), jnp.bfloat16),
        in_specs=in_specs,
        out_specs=pl.BlockSpec((None, tm, co), lambda b, m: (b, m, 0)),
        compiler_params=_cparams("parallel", "parallel"),
    )(*inputs)
    if hw_pad != hw:
        out = out[:, :hw, :]
    return out.reshape(n, ho, wo, co)


# --------------------------------------------------------------------------
# Fused conv head (1x1 + BN + swish) + global avg-pool + linear chain
# --------------------------------------------------------------------------
def _head_kernel(*refs, n_lin, inv_hw):
    x_ref, cw_ref, cb_ref = refs[0], refs[1], refs[2]
    lin_refs = refs[3:3 + 2 * n_lin]
    o_ref = refs[3 + 2 * n_lin]
    y = jnp.dot(x_ref[...], cw_ref[...], preferred_element_type=jnp.float32) + cb_ref[...]
    y = y * _sigmoid(y)                                   # swish; (hw, 1280) stays in VMEM
    feat = jnp.sum(y, axis=0, keepdims=True) * inv_hw     # global average pool -> (1, 1280)
    for i in range(n_lin):
        wl = lin_refs[2 * i][...]
        bl = lin_refs[2 * i + 1][...]
        feat = jnp.dot(feat, wl, preferred_element_type=jnp.float32) + bl
    o_ref[...] = feat.astype(o_ref.dtype)


def head_forward(x, head_w, head_b, linear):
    n, h, wsp, c = x.shape
    hw = h * wsp
    x2 = x.reshape(n, hw, c)
    embed = linear[-1][0].shape[1]
    inputs = [x2, head_w, head_b.reshape(1, -1)]
    in_specs = [pl.BlockSpec((None, hw, c), lambda b: (b, 0, 0)),
                pl.BlockSpec((c, head_w.shape[1]), lambda b: (0, 0)),
                pl.BlockSpec((1, head_w.shape[1]), lambda b: (0, 0))]
    for wl, bl in linear:
        inputs += [wl, bl.reshape(1, -1)]
        in_specs += [pl.BlockSpec(wl.shape, lambda b: (0, 0)),
                     pl.BlockSpec((1, wl.shape[1]), lambda b: (0, 0))]
    out = pl.pallas_call(
        functools.partial(_head_kernel, n_lin=len(linear), inv_hw=1.0 / float(hw)),
        grid=(n,),
        out_shape=jax.ShapeDtypeStruct((n, 1, embed), jnp.float32),
        in_specs=in_specs,
        out_specs=pl.BlockSpec((None, 1, embed), lambda b: (b, 0, 0)),
        compiler_params=_cparams("parallel"),
    )(*inputs)
    return out.reshape(n, embed)


# --------------------------------------------------------------------------
# Stem conv + MBConv glue
# --------------------------------------------------------------------------
def conv2d_stem(x, w, b, k, s):
    """Stem 3x3/2 conv: im2col in JAX (K = k*k*3 = 27, duplication negligible at 3 input
    channels) feeding the tiled bf16 matmul+swish kernel."""
    n, h, wsp, c_in = x.shape
    ho, wo = -(-h // s), -(-wsp // s)
    ph = max((ho - 1) * s + k - h, 0)
    pw = max((wo - 1) * s + k - wsp, 0)
    xp = jnp.pad(x, ((0, 0), (ph // 2, ph - ph // 2), (pw // 2, pw - pw // 2), (0, 0)))
    cols = []
    for dh in range(k):
        for dw in range(k):
            cols.append(xp[:, dh:dh + (ho - 1) * s + 1:s, dw:dw + (wo - 1) * s + 1:s, :])
    patches = jnp.stack(cols, axis=3).reshape(n * ho * wo, k * k * c_in)
    y = matmul_bias_act(patches, w, b, act="swish")
    return y.reshape(n, ho, wo, -1)


def mbconv(x, blk):
    n, h, wsp, c_in = x.shape
    inputs = x
    # expand 1x1 conv (+ folded BN + swish)
    if blk["expand_w"] is not None:
        y = matmul_bias_act(x.reshape(n * h * wsp, c_in),
                            blk["expand_w"], blk["expand_b"], act="swish")
        x = y.reshape(n, h, wsp, -1)
    # depthwise conv (+ folded BN + swish) + fused global pool + full SE gate
    x, scale = dwconv_swish_se(x, blk)
    # SE rescale + project 1x1 (+ folded BN) + residual (drop_connect disabled at inference)
    residual = inputs if (blk["stride"] == 1 and blk["in_c"] == blk["out_c"]) else None
    return se_project(x, scale, blk, residual=residual)


def efficientnet_encoder_forward(params, img_nchw):
    """img_nchw: (N, 3, H, W) float32 -> (N, num_codes * size_per_code)."""
    x = jnp.transpose(img_nchw, (0, 2, 3, 1)).astype(jnp.bfloat16)  # NCHW -> NHWC, bf16
    x = conv2d_stem(x, params["stem_w"], params["stem_b"], k=3, s=2)
    for blk in params["blocks"]:
        x = mbconv(x, blk)
    return head_forward(x, params["head_w"], params["head_b"], params["linear"])


# --------------------------------------------------------------------------
# Deterministic parameter construction (BN folded into conv weights)
# --------------------------------------------------------------------------
def _fold_bn(key, w, c_out):
    kg, kb = jax.random.split(key)
    gamma = 1.0 + 0.1 * jax.random.normal(kg, (c_out,), jnp.float32)
    beta = 0.1 * jax.random.normal(kb, (c_out,), jnp.float32)
    scale = gamma / jnp.sqrt(1.0 + BN_EPS)  # running_mean=0, running_var=1
    return w * scale, beta


def init_params(key, num_codes, size_per_code, hidden_dims=()):
    keys = iter(jax.random.split(key, 256))
    nk = lambda: next(keys)
    P = {}

    # stem: 3x3/2 conv, 3 -> 32 (weight stored im2col-style: (k*k*Cin, Cout))
    w = jax.random.normal(nk(), (3 * 3 * 3, STEM_C), jnp.float32) / math.sqrt(27)
    sw, sb = _fold_bn(nk(), w, STEM_C)
    P["stem_w"], P["stem_b"] = sw.astype(jnp.bfloat16), sb

    blocks = []
    for expand, k, stride, c_in, c_out, repeats, se_ratio in B0_BLOCKS:
        for r in range(repeats):
            b_in = c_in if r == 0 else c_out
            b_stride = stride if r == 0 else 1
            c_exp = b_in * expand
            blk = {"k": k, "stride": b_stride, "in_c": b_in, "out_c": c_out}
            if expand != 1:
                w = jax.random.normal(nk(), (b_in, c_exp), jnp.float32) / math.sqrt(b_in)
                ew, eb = _fold_bn(nk(), w, c_exp)
                blk["expand_w"], blk["expand_b"] = ew.astype(jnp.bfloat16), eb
            else:
                blk["expand_w"], blk["expand_b"] = None, None
            # depthwise weights kept f32: they feed the VPU (not MXU) and the epilogue
            # accumulation is f32 on all generations (no bf16 VALU on v5e).
            w = jax.random.normal(nk(), (k * k, c_exp), jnp.float32) / math.sqrt(k * k)
            blk["dw_w"], blk["dw_b"] = _fold_bn(nk(), w, c_exp)
            c_se = max(1, int(b_in * se_ratio))
            blk["se_r_w"] = (jax.random.normal(nk(), (c_exp, c_se), jnp.float32)
                             / math.sqrt(c_exp)).astype(jnp.bfloat16)
            blk["se_r_b"] = 0.1 * jax.random.normal(nk(), (c_se,), jnp.float32)
            blk["se_e_w"] = (jax.random.normal(nk(), (c_se, c_exp), jnp.float32)
                             / math.sqrt(c_se)).astype(jnp.bfloat16)
            blk["se_e_b"] = 0.1 * jax.random.normal(nk(), (c_exp,), jnp.float32)
            w = jax.random.normal(nk(), (c_exp, c_out), jnp.float32) / math.sqrt(c_exp)
            pw, pb = _fold_bn(nk(), w, c_out)
            blk["proj_w"], blk["proj_b"] = pw.astype(jnp.bfloat16), pb
            blocks.append(blk)
    P["blocks"] = blocks

    # conv head: 1x1, 320 -> 1280
    w = jax.random.normal(nk(), (HEAD_IN, HEAD_C), jnp.float32) / math.sqrt(HEAD_IN)
    hw_, hb_ = _fold_bn(nk(), w, HEAD_C)
    P["head_w"], P["head_b"] = hw_.astype(jnp.bfloat16), hb_

    # linear head: Sequential(Linear(...)) ending at embed_dim (kept f32, tiny)
    embed_dim = num_codes * size_per_code
    dims = [HEAD_C] + list(hidden_dims) + [embed_dim]
    lin = []
    for d_in, d_out in zip(dims[:-1], dims[1:]):
        Wl = jax.random.normal(nk(), (d_in, d_out), jnp.float32) / math.sqrt(d_in)
        bl = 0.1 * jax.random.normal(nk(), (d_out,), jnp.float32)
        lin.append((Wl, bl))
    P["linear"] = lin
    return P


# --------------------------------------------------------------------------
if __name__ == "__main__":
    key = jax.random.PRNGKey(0)
    pkey, xkey = jax.random.split(key)

    num_codes, size_per_code = 4, 8          # embed_dim = 32
    params = init_params(pkey, num_codes, size_per_code, hidden_dims=(64,))

    # small NCHW image batch, consistent with an EfficientNet input (RGB)
    img = jax.random.normal(xkey, (2, 3, 32, 32), jnp.float32)

    out = efficientnet_encoder_forward(params, img)
    out = jax.block_until_ready(out)

    assert out.shape == (2, num_codes * size_per_code), out.shape
    assert bool(jnp.all(jnp.isfinite(out)))
    print("KERNEL_OK")
</pallas_src>

<mosaic_0001>
module attributes {stable_mosaic.version = 11 : i64} {
  func.func @_matmul_kernel(%arg0: i32, %arg1: memref<512x27xbf16, #tpu.memory_space<vmem>>, %arg2: memref<27x32xbf16, #tpu.memory_space<vmem>>, %arg3: memref<1x32xf32, #tpu.memory_space<vmem>>, %arg4: memref<512x32xbf16, #tpu.memory_space<vmem>>) attributes {dimension_semantics = [#tpu.dimension_semantics<parallel>], iteration_bounds = array<i64: 1>, scalar_prefetch = 0 : i64, scratch_operands = 0 : i64, tpu.core_type = #tpu.core_type<tc>, window_params = [{transform_indices = @transform_0, window_bounds = array<i64: 512, 27>}, {pipeline_mode = #tpu.pipeline_mode<synchronous>, transform_indices = @transform_1, window_bounds = array<i64: 27, 32>}, {pipeline_mode = #tpu.pipeline_mode<synchronous>, transform_indices = @transform_2, window_bounds = array<i64: 1, 32>}, {transform_indices = @transform_3, window_bounds = array<i64: 512, 32>}]} {
    %c0 = arith.constant 0 : index
    %c0_0 = arith.constant 0 : index
    %0 = vector.load %arg1[%c0, %c0_0] : memref<512x27xbf16, #tpu.memory_space<vmem>>, vector<512x27xbf16>
    %c0_1 = arith.constant 0 : index
    %c0_2 = arith.constant 0 : index
    %1 = vector.load %arg2[%c0_1, %c0_2] : memref<27x32xbf16, #tpu.memory_space<vmem>>, vector<27x32xbf16>
    %cst = arith.constant dense<0.000000e+00> : vector<512x32xf32>
    %2 = tpu.matmul %0, %1, %cst {dimension_numbers = #tpu.dot_dimension_numbers<[1], [0], [0], [1], [0, 0, 1, 1], [], []>} : vector<512x27xbf16>, vector<27x32xbf16>, vector<512x32xf32> -> vector<512x32xf32>
    %c0_3 = arith.constant 0 : index
    %c0_4 = arith.constant 0 : index
    %3 = vector.load %arg3[%c0_3, %c0_4] : memref<1x32xf32, #tpu.memory_space<vmem>>, vector<1x32xf32>
    %4 = vector.broadcast %3 : vector<1x32xf32> to vector<512x32xf32>
    %5 = arith.addf %2, %4 : vector<512x32xf32>
    %cst_5 = arith.constant 0.000000e+00 : f32
    %6 = vector.broadcast %cst_5 : f32 to vector<512x32xf32>
    %7 = arith.subf %6, %5 : vector<512x32xf32>
    %8 = math.exp %7 : vector<512x32xf32>
    %cst_6 = arith.constant 1.000000e+00 : f32
    %9 = vector.broadcast %cst_6 : f32 to vector<512x32xf32>
    %10 = arith.addf %9, %8 : vector<512x32xf32>
    %11 = tpu.reciprocal %10 {approx = true} : vector<512x32xf32> -> vector<512x32xf32>
    %12 = arith.mulf %5, %11 : vector<512x32xf32>
    %13 = arith.truncf %12 : vector<512x32xf32> to vector<512x32xbf16>
    %c0_7 = arith.constant 0 : index
    %c0_8 = arith.constant 0 : index
    %14 = vector.load %arg4[%c0_7, %c0_8] : memref<512x32xbf16, #tpu.memory_space<vmem>>, vector<512x32xbf16>
    tpu.vector_store %arg4[%c0_7, %c0_8], %13 {strides = array<i32>} : memref<512x32xbf16, #tpu.memory_space<vmem>>, vector<512x32xbf16>,
    return
  }
  func.func @transform_0(%arg0: i32) -> (i32, i32) {
    %c0_i32 = arith.constant 0 : i32
    %c0_i32_0 = arith.constant 0 : i32
    return %arg0, %c0_i32 : i32, i32
  }
  func.func @transform_1(%arg0: i32) -> (i32, i32) {
    %c0_i32 = arith.constant 0 : i32
    %c0_i32_0 = arith.constant 0 : i32
    %c0_i32_1 = arith.constant 0 : i32
    return %c0_i32, %c0_i32_0 : i32, i32
  }
  func.func @transform_2(%arg0: i32) -> (i32, i32) {
    %c0_i32 = arith.constant 0 : i32
    %c0_i32_0 = arith.constant 0 : i32
    %c0_i32_1 = arith.constant 0 : i32
    return %c0_i32, %c0_i32_0 : i32, i32
  }
  func.func @transform_3(%arg0: i32) -> (i32, i32) {
    %c0_i32 = arith.constant 0 : i32
    %c0_i32_0 = arith.constant 0 : i32
    return %arg0, %c0_i32 : i32, i32
  }
}

</mosaic_0001>

<llo_original>
// kernel: tpu_custom_call.1
$region0: #{tpu_custom_call.1}
  #allocation0 [shape = 'u32[]', space=smem, size = 0x4, offset = 0x4, fixed_abs, tag = 'smem constant byte address 0x4 - core index']
  #allocation1 [shape = 'u32[144,128]{1,0:T(1,128)}', space=vmem, size = 0x12000, scoped, tag = 'internal scratch']
  %s0 = inlined_call_operand.vmem [shape: bf16[512,27], index: 0, kind: input, shape index: {}]
  %s1 = inlined_call_operand.vmem [shape: bf16[27,32], index: 1, kind: input, shape index: {}]
  %s2 = inlined_call_operand.vmem [shape: f32[1,32], index: 2, kind: input, shape index: {}]
  %s3 = inlined_call_operand.vmem [shape: bf16[512,32], index: 3, kind: output, shape index: {}]
  %s4 = sld [smem:[#allocation0]]
  $region22: #{tpu_custom_call.1} parent=0
    _
  %s6 = ssub.s32 1, %s4
  %s7 = scalar_select 0, %s6, %s4
  // Predicated region
  $region2: #{tpu_custom_call.1} parent=0 // pred_check
    _
  $region3: #{tpu_custom_call.1} parent=0 // pred_check_branch
    %9 = sbr.rel (0) target = $region5
  $region4: #{tpu_custom_call.1} parent=0 // pred_region
    _
  $region5: #{tpu_custom_call.1} parent=0 // pred_fallthru
    _
  // Predicated region
  $region6: #{tpu_custom_call.1} parent=0 // pred_check
    _
  $region7: #{tpu_custom_call.1} parent=0 // pred_check_branch
    %11 = sbr.rel (0) target = $region9
  $region8: #{tpu_custom_call.1} parent=0 // pred_region
    _
  $region9: #{tpu_custom_call.1} parent=0 // pred_fallthru
    _
  // Predicated region
  $region10: #{tpu_custom_call.1} parent=0 // pred_check
    _
  $region11: #{tpu_custom_call.1} parent=0 // pred_check_branch
    %13 = sbr.rel (0) target = $region13
  $region12: #{tpu_custom_call.1} parent=0 // pred_region
    _
  $region13: #{tpu_custom_call.1} parent=0 // pred_fallthru
    _
  %v15 = vld [vmem:[%s0] sm:$0xf]
  %v16 = vld [vmem:[%s0 + $0x4] sm:$0xf]
  %v17 = vld [vmem:[%s0 + $0x8] sm:$0xf]
  %v18 = vld [vmem:[%s0 + $0xc] sm:$0xf]
  %v19 = vld [vmem:[%s0 + $0x10] sm:$0xf]
  %v20 = vld [vmem:[%s0 + $0x14] sm:$0xf]
  %v21 = vld [vmem:[%s0 + $0x18] sm:$0xf]
  %v22 = vld [vmem:[%s0 + $0x1c] sm:$0xf]
  %v23 = vld [vmem:[%s0 + $0x20] sm:$0xf]
  %v24 = vld [vmem:[%s0 + $0x24] sm:$0xf]
  %v25 = vld [vmem:[%s0 + $0x28] sm:$0xf]
  %v26 = vld [vmem:[%s0 + $0x2c] sm:$0xf]
  %v27 = vld [vmem:[%s0 + $0x30] sm:$0xf]
  %v28 = vld [vmem:[%s0 + $0x34] sm:$0xf]
  %v29 = vld [vmem:[%s0 + $0x38] sm:$0xf]
  %v30 = vld [vmem:[%s0 + $0x3c] sm:$0xf]
  %v31 = vld [vmem:[%s0 + $0x40] sm:$0xf]
  %v32 = vld [vmem:[%s0 + $0x44] sm:$0xf]
  %v33 = vld [vmem:[%s0 + $0x48] sm:$0xf]
  %v34 = vld [vmem:[%s0 + $0x4c] sm:$0xf]
  %v35 = vld [vmem:[%s0 + $0x50] sm:$0xf]
  %v36 = vld [vmem:[%s0 + $0x54] sm:$0xf]
  %v37 = vld [vmem:[%s0 + $0x58] sm:$0xf]
  %v38 = vld [vmem:[%s0 + $0x5c] sm:$0xf]
  %v39 = vld [vmem:[%s0 + $0x60] sm:$0xf]
  %v40 = vld [vmem:[%s0 + $0x64] sm:$0xf]
  %v41 = vld [vmem:[%s0 + $0x68] sm:$0xf]
  %v42 = vld [vmem:[%s0 + $0x6c] sm:$0xf]
  %v43 = vld [vmem:[%s0 + $0x70] sm:$0xf]
  %v44 = vld [vmem:[%s0 + $0x74] sm:$0xf]
  %v45 = vld [vmem:[%s0 + $0x78] sm:$0xf]
  %v46 = vld [vmem:[%s0 + $0x7c] sm:$0xf]
  %v47 = vld [vmem:[%s0 + $0x80] sm:$0xf]
  %v48 = vld [vmem:[%s0 + $0x84] sm:$0xf]
  %v49 = vld [vmem:[%s0 + $0x88] sm:$0xf]
  %v50 = vld [vmem:[%s0 + $0x8c] sm:$0xf]
  %v51 = vld [vmem:[%s0 + $0x90] sm:$0xf]
  %v52 = vld [vmem:[%s0 + $0x94] sm:$0xf]
  %v53 = vld [vmem:[%s0 + $0x98] sm:$0xf]
  %v54 = vld [vmem:[%s0 + $0x9c] sm:$0xf]
  %v55 = vld [vmem:[%s0 + $0xa0] sm:$0xf]
  %v56 = vld [vmem:[%s0 + $0xa4] sm:$0xf]
  %v57 = vld [vmem:[%s0 + $0xa8] sm:$0xf]
  %v58 = vld [vmem:[%s0 + $0xac] sm:$0xf]
  %v59 = vld [vmem:[%s0 + $0xb0] sm:$0xf]
  %v60 = vld [vmem:[%s0 + $0xb4] sm:$0xf]
  %v61 = vld [vmem:[%s0 + $0xb8] sm:$0xf]
  %v62 = vld [vmem:[%s0 + $0xbc] sm:$0xf]
  %v63 = vld [vmem:[%s0 + $0xc0] sm:$0xf]
  %v64 = vld [vmem:[%s0 + $0xc4] sm:$0xf]
  %v65 = vld [vmem:[%s0 + $0xc8] sm:$0xf]
  %v66 = vld [vmem:[%s0 + $0xcc] sm:$0xf]
  %v67 = vld [vmem:[%s0 + $0xd0] sm:$0xf]
  %v68 = vld [vmem:[%s0 + $0xd4] sm:$0xf]
  %v69 = vld [vmem:[%s0 + $0xd8] sm:$0xf]
  %v70 = vld [vmem:[%s0 + $0xdc] sm:$0xf]
  %v71 = vld [vmem:[%s0 + $0xe0] sm:$0xf]
  %v72 = vld [vmem:[%s0 + $0xe4] sm:$0xf]
  %v73 = vld [vmem:[%s0 + $0xe8] sm:$0xf]
  %v74 = vld [vmem:[%s0 + $0xec] sm:$0xf]
  %v75 = vld [vmem:[%s0 + $0xf0] sm:$0xf]
  %v76 = vld [vmem:[%s0 + $0xf4] sm:$0xf]
  %v77 = vld [vmem:[%s0 + $0xf8] sm:$0xf]
  %v78 = vld [vmem:[%s0 + $0xfc] sm:$0xf]
  %v79 = vld [vmem:[%s1] sm:$0xf]
  %v80 = vld [vmem:[%s1 + $0x4] sm:$0xf]
  %v81 = vld [vmem:[%s1 + $0x8] sm:$0xf]
  %v82 = vld [vmem:[%s1 + $0xc] sm:$0x3]
  %v83 = vld [vmem:[%s2] sm:$0x1]
  %v85 = vlaneseq
  %v86 = vshrl.u32 %v85, 7
  %v87 = vsub.s32 0, %v86
  %v88 = vrot.slane %v83, %v87
  %v154 = vunpack.c.l.b16 %v15
  %v155 = vunpack.c.l.b16 %v16
  %v156 = vunpack.c.l.b16 %v17
  %v157 = vunpack.c.l.b16 %v18
  %v158 = vunpack.c.l.b16 %v19
  %v159 = vunpack.c.l.b16 %v20
  %v160 = vunpack.c.l.b16 %v21
  %v161 = vunpack.c.l.b16 %v22
  %v162 = vunpack.c.l.b16 %v23
  %v163 = vunpack.c.l.b16 %v24
  %v164 = vunpack.c.l.b16 %v25
  %v165 = vunpack.c.l.b16 %v26
  %v166 = vunpack.c.l.b16 %v27
  %v167 = vunpack.c.l.b16 %v28
  %v168 = vunpack.c.l.b16 %v29
  %v169 = vunpack.c.l.b16 %v30
  %v170 = vunpack.c.l.b16 %v31
  %v171 = vunpack.c.l.b16 %v32
  %v172 = vunpack.c.l.b16 %v33
  %v173 = vunpack.c.l.b16 %v34
  %v174 = vunpack.c.l.b16 %v35
  %v175 = vunpack.c.l.b16 %v36
  %v176 = vunpack.c.l.b16 %v37
  %v177 = vunpack.c.l.b16 %v38
  %v178 = vunpack.c.l.b16 %v39
  %v179 = vunpack.c.l.b16 %v40
  %v180 = vunpack.c.l.b16 %v41
  %v181 = vunpack.c.l.b16 %v42
  %v182 = vunpack.c.l.b16 %v43
  %v183 = vunpack.c.l.b16 %v44
  %v184 = vunpack.c.l.b16 %v45
  %v185 = vunpack.c.l.b16 %v46
  %v186 = vunpack.c.l.b16 %v47
  %v187 = vunpack.c.l.b16 %v48
  %v188 = vunpack.c.l.b16 %v49
  %v189 = vunpack.c.l.b16 %v50
  %v190 = vunpack.c.l.b16 %v51
  %v191 = vunpack.c.l.b16 %v52
  %v192 = vunpack.c.l.b16 %v53
  %v193 = vunpack.c.l.b16 %v54
  %v194 = vunpack.c.l.b16 %v55
  %v195 = vunpack.c.l.b16 %v56
  %v196 = vunpack.c.l.b16 %v57
  %v197 = vunpack.c.l.b16 %v58
  %v198 = vunpack.c.l.b16 %v59
  %v199 = vunpack.c.l.b16 %v60
  %v200 = vunpack.c.l.b16 %v61
  %v201 = vunpack.c.l.b16 %v62
  %v202 = vunpack.c.l.b16 %v63
  %v203 = vunpack.c.l.b16 %v64
  %v204 = vunpack.c.l.b16 %v65
  %v205 = vunpack.c.l.b16 %v66
  %v206 = vunpack.c.l.b16 %v67
  %v207 = vunpack.c.l.b16 %v68
  %v208 = vunpack.c.l.b16 %v69
  %v209 = vunpack.c.l.b16 %v70
  %v210 = vunpack.c.l.b16 %v71
  %v211 = vunpack.c.l.b16 %v72
  %v212 = vunpack.c.l.b16 %v73
  %v213 = vunpack.c.l.b16 %v74
  %v214 = vunpack.c.l.b16 %v75
  %v215 = vunpack.c.l.b16 %v76
  %v216 = vunpack.c.l.b16 %v77
  %v217 = vunpack.c.l.b16 %v78
  %v218 = vpack.c.b16 %v155, %v154
  %v219 = vpack.c.b16 %v157, %v156
  %v220 = vpack.c.b16 %v159, %v158
  %v221 = vpack.c.b16 %v161, %v160
  %v222 = vpack.c.b16 %v163, %v162
  %v223 = vpack.c.b16 %v165, %v164
  %v224 = vpack.c.b16 %v167, %v166
  %v225 = vpack.c.b16 %v169, %v168
  %v226 = vpack.c.b16 %v171, %v170
  %v227 = vpack.c.b16 %v173, %v172
  %v228 = vpack.c.b16 %v175, %v174
  %v229 = vpack.c.b16 %v177, %v176
  %v230 = vpack.c.b16 %v179, %v178
  %v231 = vpack.c.b16 %v181, %v180
  %v232 = vpack.c.b16 %v183, %v182
  %v233 = vpack.c.b16 %v185, %v184
  %v234 = vpack.c.b16 %v187, %v186
  %v235 = vpack.c.b16 %v189, %v188
  %v236 = vpack.c.b16 %v191, %v190
  %v237 = vpack.c.b16 %v193, %v192
  %v238 = vpack.c.b16 %v195, %v194
  %v239 = vpack.c.b16 %v197, %v196
  %v240 = vpack.c.b16 %v199, %v198
  %v241 = vpack.c.b16 %v201, %v200
  %v242 = vpack.c.b16 %v203, %v202
  %v243 = vpack.c.b16 %v205, %v204
  %v244 = vpack.c.b16 %v207, %v206
  %v245 = vpack.c.b16 %v209, %v208
  %v246 = vpack.c.b16 %v211, %v210
  %v247 = vpack.c.b16 %v213, %v212
  %v248 = vpack.c.b16 %v215, %v214
  %v249 = vpack.c.b16 %v217, %v216
  %v254 = vunpack.c.l.b16 %v79
  %v255 = vunpack.c.l.b16 %v80
  %v256 = vunpack.c.l.b16 %v81
  %v257 = vunpack.c.l.b16 %v82
  %v258 = vpack.c.b16 %v255, %v254
  %v259 = vpack.c.b16 %v257, %v256
  %vm261 = vcmask 220160
  %v263 = vsel %vm261, %v218, 0
  %v266 = vsel %vm261, %v219, 0
  %v269 = vsel %vm261, %v220, 0
  %v272 = vsel %vm261, %v221, 0
  %v275 = vsel %vm261, %v222, 0
  %v278 = vsel %vm261, %v223, 0
  %v281 = vsel %vm261, %v224, 0
  %v284 = vsel %vm261, %v225, 0
  %v287 = vsel %vm261, %v226, 0
  %v290 = vsel %vm261, %v227, 0
  %v293 = vsel %vm261, %v228, 0
  %v296 = vsel %vm261, %v229, 0
  %v299 = vsel %vm261, %v230, 0
  %v302 = vsel %vm261, %v231, 0
  %v305 = vsel %vm261, %v232, 0
  %v308 = vsel %vm261, %v233, 0
  %v311 = vsel %vm261, %v234, 0
  %v314 = vsel %vm261, %v235, 0
  %v317 = vsel %vm261, %v236, 0
  %v320 = vsel %vm261, %v237, 0
  %v323 = vsel %vm261, %v238, 0
  %v326 = vsel %vm261, %v239, 0
  %v329 = vsel %vm261, %v240, 0
  %v332 = vsel %vm261, %v241, 0
  %v335 = vsel %vm261, %v242, 0
  %v338 = vsel %vm261, %v243, 0
  %v341 = vsel %vm261, %v244, 0
  %v344 = vsel %vm261, %v245, 0
  %v347 = vsel %vm261, %v246, 0
  %v350 = vsel %vm261, %v247, 0
  %v353 = vsel %vm261, %v248, 0
  %v356 = vsel %vm261, %v249, 0
  %vm358 = vcmask 1044480
  %vm359 = vcmask 1045504
  %v360 = vsel %vm358, 4294967295, 65535
  %v361 = vsel %vm359, %v360, 0
  %v363 = vand.u32 %v259, %v361
  %365 = vmatprep.subr.bf16.mxu0 0
  %366 = vmatpush1.bf16.msra.mxu0 %v258
  %367 = vmatprep.subr.bf16.mxu0 0
  %368 = vmatpush1.bf16.msra.mxu0 %v363
  %369 = vmatprep.subr.bf16.mxu0 0
  %370 = vmatpush1.bf16.msra.mxu0 0
  %371 = vmatprep.subr.bf16.mxu0 0
  %372 = vmatpush1.bf16.msra.mxu0 0
  %373 = vmatprep.subr.bf16.mxu0 0
  %374 = vmatpush1.bf16.msra.mxu0 0
  %375 = vmatprep.subr.bf16.mxu0 0
  %376 = vmatpush1.bf16.msra.mxu0 0
  %377 = vmatprep.subr.bf16.mxu0 0
  %378 = vmatpush1.bf16.msra.mxu0 0
  %379 = vmatprep.subr.bf16.mxu0 0
  %380 = vmatpush1.bf16.msra.mxu0 0
  %381 = vmatprep.subr.bf16.mxu0 0
  %382 = vmatpush1.bf16.msra.mxu0 0
  %383 = vmatprep.subr.bf16.mxu0 0
  %384 = vmatpush1.bf16.msra.mxu0 0
  %385 = vmatprep.subr.bf16.mxu0 0
  %386 = vmatpush1.bf16.msra.mxu0 0
  %387 = vmatprep.subr.bf16.mxu0 0
  %388 = vmatpush1.bf16.msra.mxu0 0
  %389 = vmatprep.subr.bf16.mxu0 0
  %390 = vmatpush1.bf16.msra.mxu0 0
  %391 = vmatprep.subr.bf16.mxu0 0
  %392 = vmatpush1.bf16.msra.mxu0 0
  %393 = vmatprep.subr.bf16.mxu0 0
  %394 = vmatpush1.bf16.msra.mxu0 0
  %395 = vmatprep.subr.bf16.mxu0 0
  %396 = vmatpush1.bf16.msra.mxu0 0
  %397 = vmatprep.mubr.bf16.mxu0 0
  %398 = vmatmul.mubr.bf16.gmra.mrb[0].mxu0 %v263
  %v399 = vpop.f32.mrb[0].mxu0
  %v400 = vadd.f32 %v88, %v399
  %v401 = vpop.f32.mrb[0].mxu0
  %v402 = vpop.f32.mrb[0].mxu0
  %v403 = vadd.f32 %v88, %v402
  %v404 = vpop.f32.mrb[0].mxu0
  %405 = vmatprep.mubr.bf16.mxu0 0
  %406 = vmatmul.mubr.bf16.gmra.mrb[0].mxu0 %v266
  %v407 = vpop.f32.mrb[0].mxu0
  %v408 = vadd.f32 %v88, %v407
  %v409 = vpop.f32.mrb[0].mxu0
  %v410 = vpop.f32.mrb[0].mxu0
  %v411 = vadd.f32 %v88, %v410
  %v412 = vpop.f32.mrb[0].mxu0
  %413 = vmatprep.mubr.bf16.mxu0 0
  %414 = vmatmul.mubr.bf16.gmra.mrb[0].mxu0 %v269
  %v415 = vpop.f32.mrb[0].mxu0
  %v416 = vadd.f32 %v88, %v415
  %v417 = vpop.f32.mrb[0].mxu0
  %v418 = vpop.f32.mrb[0].mxu0
  %v419 = vadd.f32 %v88, %v418
  %v420 = vpop.f32.mrb[0].mxu0
  %421 = vmatprep.mubr.bf16.mxu0 0
  %422 = vmatmul.mubr.bf16.gmra.mrb[0].mxu0 %v272
  %v423 = vpop.f32.mrb[0].mxu0
  %v424 = vadd.f32 %v88, %v423
  %v425 = vpop.f32.mrb[0].mxu0
  %v426 = vpop.f32.mrb[0].mxu0
  %v427 = vadd.f32 %v88, %v426
  %v428 = vpop.f32.mrb[0].mxu0
  %429 = vmatprep.mubr.bf16.mxu0 0
  %430 = vmatmul.mubr.bf16.gmra.mrb[0].mxu0 %v275
  %v431 = vpop.f32.mrb[0].mxu0
  %v432 = vadd.f32 %v88, %v431
  %v433 = vpop.f32.mrb[0].mxu0
  %v434 = vpop.f32.mrb[0].mxu0
  %v435 = vadd.f32 %v88, %v434
  %v436 = vpop.f32.mrb[0].mxu0
  %437 = vmatprep.mubr.bf16.mxu0 0
  %438 = vmatmul.mubr.bf16.gmra.mrb[0].mxu0 %v278
  %v439 = vpop.f32.mrb[0].mxu0
  %v440 = vadd.f32 %v88, %v439
  %v441 = vpop.f32.mrb[0].mxu0
  %v442 = vpop.f32.mrb[0].mxu0
  %v443 = vadd.f32 %v88, %v442
  %v444 = vpop.f32.mrb[0].mxu0
  %445 = vmatprep.mubr.bf16.mxu0 0
  %446 = vmatmul.mubr.bf16.gmra.mrb[0].mxu0 %v281
  %v447 = vpop.f32.mrb[0].mxu0
  %v448 = vadd.f32 %v88, %v447
  %v449 = vpop.f32.mrb[0].mxu0
  %v450 = vpop.f32.mrb[0].mxu0
  %v451 = vadd.f32 %v88, %v450
  %v452 = vpop.f32.mrb[0].mxu0
  %453 = vmatprep.mubr.bf16.mxu0 0
  %454 = vmatmul.mubr.bf16.gmra.mrb[0].mxu0 %v284
  %v455 = vpop.f32.mrb[0].mxu0
  %v456 = vadd.f32 %v88, %v455
  %v457 = vpop.f32.mrb[0].mxu0
  %v458 = vpop.f32.mrb[0].mxu0
  %v459 = vadd.f32 %v88, %v458
  %v460 = vpop.f32.mrb[0].mxu0
  %461 = vmatprep.mubr.bf16.mxu0 0
  %462 = vmatmul.mubr.bf16.gmra.mrb[0].mxu0 %v287
  %v463 = vpop.f32.mrb[0].mxu0
  %v464 = vadd.f32 %v88, %v463
  %v465 = vpop.f32.mrb[0].mxu0
  %v466 = vpop.f32.mrb[0].mxu0
  %v467 = vadd.f32 %v88, %v466
  %v468 = vpop.f32.mrb[0].mxu0
  %469 = vmatprep.mubr.bf16.mxu0 0
  %470 = vmatmul.mubr.bf16.gmra.mrb[0].mxu0 %v290
  %v471 = vpop.f32.mrb[0].mxu0
  %v472 = vadd.f32 %v88, %v471
  %v473 = vpop.f32.mrb[0].mxu0
  %v474 = vpop.f32.mrb[0].mxu0
  %v475 = vadd.f32 %v88, %v474
  %v476 = vpop.f32.mrb[0].mxu0
  %477 = vmatprep.mubr.bf16.mxu0 0
  %478 = vmatmul.mubr.bf16.gmra.mrb[0].mxu0 %v293
  %v479 = vpop.f32.mrb[0].mxu0
  %v480 = vadd.f32 %v88, %v479
  %v481 = vpop.f32.mrb[0].mxu0
  %v482 = vpop.f32.mrb[0].mxu0
  %v483 = vadd.f32 %v88, %v482
  %v484 = vpop.f32.mrb[0].mxu0
  %485 = vmatprep.mubr.bf16.mxu0 0
  %486 = vmatmul.mubr.bf16.gmra.mrb[0].mxu0 %v296
  %v487 = vpop.f32.mrb[0].mxu0
  %v488 = vadd.f32 %v88, %v487
  %v489 = vpop.f32.mrb[0].mxu0
  %v490 = vpop.f32.mrb[0].mxu0
  %v491 = vadd.f32 %v88, %v490
  %v492 = vpop.f32.mrb[0].mxu0
  %493 = vmatprep.mubr.bf16.mxu0 0
  %494 = vmatmul.mubr.bf16.gmra.mrb[0].mxu0 %v299
  %v495 = vpop.f32.mrb[0].mxu0
  %v496 = vadd.f32 %v88, %v495
  %v497 = vpop.f32.mrb[0].mxu0
  %v498 = vpop.f32.mrb[0].mxu0
  %v499 = vadd.f32 %v88, %v498
  %v500 = vpop.f32.mrb[0].mxu0
  %501 = vmatprep.mubr.bf16.mxu0 0
  %502 = vmatmul.mubr.bf16.gmra.mrb[0].mxu0 %v302
  %v503 = vpop.f32.mrb[0].mxu0
  %v504 = vadd.f32 %v88, %v503
  %v505 = vpop.f32.mrb[0].mxu0
  %v506 = vpop.f32.mrb[0].mxu0
  %v507 = vadd.f32 %v88, %v506
  %v508 = vpop.f32.mrb[0].mxu0
  %509 = vmatprep.mubr.bf16.mxu0 0
  %510 = vmatmul.mubr.bf16.gmra.mrb[0].mxu0 %v305
  %v511 = vpop.f32.mrb[0].mxu0
  %v512 = vadd.f32 %v88, %v511
  %v513 = vpop.f32.mrb[0].mxu0
  %v514 = vpop.f32.mrb[0].mxu0
  %v515 = vadd.f32 %v88, %v514
  %v516 = vpop.f32.mrb[0].mxu0
  %517 = vmatprep.mubr.bf16.mxu0 0
  %518 = vmatmul.mubr.bf16.gmra.mrb[0].mxu0 %v308
  %v519 = vpop.f32.mrb[0].mxu0
  %v520 = vadd.f32 %v88, %v519
  %v521 = vpop.f32.mrb[0].mxu0
  %v522 = vpop.f32.mrb[0].mxu0
  %v523 = vadd.f32 %v88, %v522
  %v524 = vpop.f32.mrb[0].mxu0
  %525 = vmatprep.mubr.bf16.mxu0 0
  %526 = vmatmul.mubr.bf16.gmra.mrb[0].mxu0 %v311
  %v527 = vpop.f32.mrb[0].mxu0
  %v528 = vadd.f32 %v88, %v527
  %v529 = vpop.f32.mrb[0].mxu0
  %v530 = vpop.f32.mrb[0].mxu0
  %v531 = vadd.f32 %v88, %v530
  %v532 = vpop.f32.mrb[0].mxu0
  %533 = vmatprep.mubr.bf16.mxu0 0
  %534 = vmatmul.mubr.bf16.gmra.mrb[0].mxu0 %v314
  %v535 = vpop.f32.mrb[0].mxu0
  %v536 = vadd.f32 %v88, %v535
  %v537 = vpop.f32.mrb[0].mxu0
  %v538 = vpop.f32.mrb[0].mxu0
  %v539 = vadd.f32 %v88, %v538
  %v540 = vpop.f32.mrb[0].mxu0
  %541 = vmatprep.mubr.bf16.mxu0 0
  %542 = vmatmul.mubr.bf16.gmra.mrb[0].mxu0 %v317
  %v543 = vpop.f32.mrb[0].mxu0
  %v544 = vadd.f32 %v88, %v543
  %v545 = vpop.f32.mrb[0].mxu0
  %v546 = vpop.f32.mrb[0].mxu0
  %v547 = vadd.f32 %v88, %v546
  %v548 = vpop.f32.mrb[0].mxu0
  %549 = vmatprep.mubr.bf16.mxu0 0
  %550 = vmatmul.mubr.bf16.gmra.mrb[0].mxu0 %v320
  %v551 = vpop.f32.mrb[0].mxu0
  %v552 = vadd.f32 %v88, %v551
  %v553 = vpop.f32.mrb[0].mxu0
  %v554 = vpop.f32.mrb[0].mxu0
  %v555 = vadd.f32 %v88, %v554
  %v556 = vpop.f32.mrb[0].mxu0
  %557 = vmatprep.mubr.bf16.mxu0 0
  %558 = vmatmul.mubr.bf16.gmra.mrb[0].mxu0 %v323
  %v559 = vpop.f32.mrb[0].mxu0
  %v560 = vadd.f32 %v88, %v559
  %v561 = vpop.f32.mrb[0].mxu0
  %v562 = vpop.f32.mrb[0].mxu0
  %v563 = vadd.f32 %v88, %v562
  %v564 = vpop.f32.mrb[0].mxu0
  %565 = vmatprep.mubr.bf16.mxu0 0
  %566 = vmatmul.mubr.bf16.gmra.mrb[0].mxu0 %v326
  %v567 = vpop.f32.mrb[0].mxu0
  %v568 = vadd.f32 %v88, %v567
  %v569 = vpop.f32.mrb[0].mxu0
  %v570 = vpop.f32.mrb[0].mxu0
  %v571 = vadd.f32 %v88, %v570
  %v572 = vpop.f32.mrb[0].mxu0
  %573 = vmatprep.mubr.bf16.mxu0 0
  %574 = vmatmul.mubr.bf16.gmra.mrb[0].mxu0 %v329
  %v575 = vpop.f32.mrb[0].mxu0
  %v576 = vadd.f32 %v88, %v575
  %v577 = vpop.f32.mrb[0].mxu0
  %v578 = vpop.f32.mrb[0].mxu0
  %v579 = vadd.f32 %v88, %v578
  %v580 = vpop.f32.mrb[0].mxu0
  %581 = vmatprep.mubr.bf16.mxu0 0
  %582 = vmatmul.mubr.bf16.gmra.mrb[0].mxu0 %v332
  %v583 = vpop.f32.mrb[0].mxu0
  %v584 = vadd.f32 %v88, %v583
  %v585 = vpop.f32.mrb[0].mxu0
  %v586 = vpop.f32.mrb[0].mxu0
  %v587 = vadd.f32 %v88, %v586
  %v588 = vpop.f32.mrb[0].mxu0
  %589 = vmatprep.mubr.bf16.mxu0 0
  %590 = vmatmul.mubr.bf16.gmra.mrb[0].mxu0 %v335
  %v591 = vpop.f32.mrb[0].mxu0
  %v592 = vadd.f32 %v88, %v591
  %v593 = vpop.f32.mrb[0].mxu0
  %v594 = vpop.f32.mrb[0].mxu0
  %v595 = vadd.f32 %v88, %v594
  %v596 = vpop.f32.mrb[0].mxu0
  %597 = vmatprep.mubr.bf16.mxu0 0
  %598 = vmatmul.mubr.bf16.gmra.mrb[0].mxu0 %v338
  %v599 = vpop.f32.mrb[0].mxu0
  %v600 = vadd.f32 %v88, %v599
  %v601 = vpop.f32.mrb[0].mxu0
  %v602 = vpop.f32.mrb[0].mxu0
  %v603 = vadd.f32 %v88, %v602
  %v604 = vpop.f32.mrb[0].mxu0
  %605 = vmatprep.mubr.bf16.mxu0 0
  %606 = vmatmul.mubr.bf16.gmra.mrb[0].mxu0 %v341
  %v607 = vpop.f32.mrb[0].mxu0
  %v608 = vadd.f32 %v88, %v607
  %v609 = vpop.f32.mrb[0].mxu0
  %v610 = vpop.f32.mrb[0].mxu0
  %v611 = vadd.f32 %v88, %v610
  %v612 = vpop.f32.mrb[0].mxu0
  %613 = vmatprep.mubr.bf16.mxu0 0
  %614 = vmatmul.mubr.bf16.gmra.mrb[0].mxu0 %v344
  %v615 = vpop.f32.mrb[0].mxu0
  %v616 = vadd.f32 %v88, %v615
  %v617 = vpop.f32.mrb[0].mxu0
  %v618 = vpop.f32.mrb[0].mxu0
  %v619 = vadd.f32 %v88, %v618
  %v620 = vpop.f32.mrb[0].mxu0
  %621 = vmatprep.mubr.bf16.mxu0 0
  %622 = vmatmul.mubr.bf16.gmra.mrb[0].mxu0 %v347
  %v623 = vpop.f32.mrb[0].mxu0
  %v624 = vadd.f32 %v88, %v623
  %v625 = vpop.f32.mrb[0].mxu0
  %v626 = vpop.f32.mrb[0].mxu0
  %v627 = vadd.f32 %v88, %v626
  %v628 = vpop.f32.mrb[0].mxu0
  %629 = vmatprep.mubr.bf16.mxu0 0
  %630 = vmatmul.mubr.bf16.gmra.mrb[0].mxu0 %v350
  %v631 = vpop.f32.mrb[0].mxu0
  %v632 = vadd.f32 %v88, %v631
  %v633 = vpop.f32.mrb[0].mxu0
  %v634 = vpop.f32.mrb[0].mxu0
  %v635 = vadd.f32 %v88, %v634
  %v636 = vpop.f32.mrb[0].mxu0
  %637 = vmatprep.mubr.bf16.mxu0 0
  %638 = vmatmul.mubr.bf16.gmra.mrb[0].mxu0 %v353
  %v639 = vpop.f32.mrb[0].mxu0
  %v640 = vadd.f32 %v88, %v639
  %v641 = vpop.f32.mrb[0].mxu0
  %v642 = vpop.f32.mrb[0].mxu0
  %v643 = vadd.f32 %v88, %v642
  %v644 = vpop.f32.mrb[0].mxu0
  %645 = vmatprep.mubr.bf16.mxu0 0
  %646 = vmatmul.mubr.bf16.gmra.mrb[0].mxu0 %v356
  %v647 = vpop.f32.mrb[0].mxu0
  %v648 = vadd.f32 %v88, %v647
  %v649 = vpop.f32.mrb[0].mxu0
  %v650 = vpop.f32.mrb[0].mxu0
  %v651 = vadd.f32 %v88, %v650
  %v652 = vpop.f32.mrb[0].mxu0
  %653 = vdwg.mxu0
  %v654 = vsub.f32 0.0, %v400
  %v655 = vsub.f32 0.0, %v403
  %v656 = vsub.f32 0.0, %v408
  %v657 = vsub.f32 0.0, %v411
  %v658 = vsub.f32 0.0, %v416
  %v659 = vsub.f32 0.0, %v419
  %v660 = vsub.f32 0.0, %v424
  %v661 = vsub.f32 0.0, %v427
  %v662 = vsub.f32 0.0, %v432
  %v663 = vsub.f32 0.0, %v435
  %v664 = vsub.f32 0.0, %v440
  %v665 = vsub.f32 0.0, %v443
  %v666 = vsub.f32 0.0, %v448
  %v667 = vsub.f32 0.0, %v451
  %v668 = vsub.f32 0.0, %v456
  %v669 = vsub.f32 0.0, %v459
  %v670 = vsub.f32 0.0, %v464
  %v671 = vsub.f32 0.0, %v467
  %v672 = vsub.f32 0.0, %v472
  %v673 = vsub.f32 0.0, %v475
  %v674 = vsub.f32 0.0, %v480
  %v675 = vsub.f32 0.0, %v483
  %v676 = vsub.f32 0.0, %v488
  %v677 = vsub.f32 0.0, %v491
  %v678 = vsub.f32 0.0, %v496
  %v679 = vsub.f32 0.0, %v499
  %v680 = vsub.f32 0.0, %v504
  %v681 = vsub.f32 0.0, %v507
  %v682 = vsub.f32 0.0, %v512
  %v683 = vsub.f32 0.0, %v515
  %v684 = vsub.f32 0.0, %v520
  %v685 = vsub.f32 0.0, %v523
  %v686 = vsub.f32 0.0, %v528
  %v687 = vsub.f32 0.0, %v531
  %v688 = vsub.f32 0.0, %v536
  %v689 = vsub.f32 0.0, %v539
  %v690 = vsub.f32 0.0, %v544
  %v691 = vsub.f32 0.0, %v547
  %v692 = vsub.f32 0.0, %v552
  %v693 = vsub.f32 0.0, %v555
  %v694 = vsub.f32 0.0, %v560
  %v695 = vsub.f32 0.0, %v563
  %v696 = vsub.f32 0.0, %v568
  %v697 = vsub.f32 0.0, %v571
  %v698 = vsub.f32 0.0, %v576
  %v699 = vsub.f32 0.0, %v579
  %v700 = vsub.f32 0.0, %v584
  %v701 = vsub.f32 0.0, %v587
  %v702 = vsub.f32 0.0, %v592
  %v703 = vsub.f32 0.0, %v595
  %v704 = vsub.f32 0.0, %v600
  %v705 = vsub.f32 0.0, %v603
  %v706 = vsub.f32 0.0, %v608
  %v707 = vsub.f32 0.0, %v611
  %v708 = vsub.f32 0.0, %v616
  %v709 = vsub.f32 0.0, %v619
  %v710 = vsub.f32 0.0, %v624
  %v711 = vsub.f32 0.0, %v627
  %v712 = vsub.f32 0.0, %v632
  %v713 = vsub.f32 0.0, %v635
  %v714 = vsub.f32 0.0, %v640
  %v715 = vsub.f32 0.0, %v643
  %v716 = vsub.f32 0.0, %v648
  %v717 = vsub.f32 0.0, %v651
  %v718 = vmul.f32 %v654, 1.442695
  %v719 = vpow.pop %v718
  %v720 = vmul.f32 %v655, 1.442695
  %v721 = vpow.pop %v720
  %v722 = vmul.f32 %v656, 1.442695
  %v723 = vpow.pop %v722
  %v724 = vmul.f32 %v657, 1.442695
  %v725 = vpow.pop %v724
  %v726 = vmul.f32 %v658, 1.442695
  %v727 = vpow.pop %v726
  %v728 = vmul.f32 %v659, 1.442695
  %v729 = vpow.pop %v728
  %v730 = vmul.f32 %v660, 1.442695
  %v731 = vpow.pop %v730
  %v732 = vmul.f32 %v661, 1.442695
  %v733 = vpow.pop %v732
  %v734 = vmul.f32 %v662, 1.442695
  %v735 = vpow.pop %v734
  %v736 = vmul.f32 %v663, 1.442695
  %v737 = vpow.pop %v736
  %v738 = vmul.f32 %v664, 1.442695
  %v739 = vpow.pop %v738
  %v740 = vmul.f32 %v665, 1.442695
  %v741 = vpow.pop %v740
  %v742 = vmul.f32 %v666, 1.442695
  %v743 = vpow.pop %v742
  %v744 = vmul.f32 %v667, 1.442695
  %v745 = vpow.pop %v744
  %v746 = vmul.f32 %v668, 1.442695
  %v747 = vpow.pop %v746
  %v748 = vmul.f32 %v669, 1.442695
  %v749 = vpow.pop %v748
  %v750 = vmul.f32 %v670, 1.442695
  %v751 = vpow.pop %v750
  %v752 = vmul.f32 %v671, 1.442695
  %v753 = vpow.pop %v752
  %v754 = vmul.f32 %v672, 1.442695
  %v755 = vpow.pop %v754
  %v756 = vmul.f32 %v673, 1.442695
  %v757 = vpow.pop %v756
  %v758 = vmul.f32 %v674, 1.442695
  %v759 = vpow.pop %v758
  %v760 = vmul.f32 %v675, 1.442695
  %v761 = vpow.pop %v760
  %v762 = vmul.f32 %v676, 1.442695
  %v763 = vpow.pop %v762
  %v764 = vmul.f32 %v677, 1.442695
  %v765 = vpow.pop %v764
  %v766 = vmul.f32 %v678, 1.442695
  %v767 = vpow.pop %v766
  %v768 = vmul.f32 %v679, 1.442695
  %v769 = vpow.pop %v768
  %v770 = vmul.f32 %v680, 1.442695
  %v771 = vpow.pop %v770
  %v772 = vmul.f32 %v681, 1.442695
  %v773 = vpow.pop %v772
  %v774 = vmul.f32 %v682, 1.442695
  %v775 = vpow.pop %v774
  %v776 = vmul.f32 %v683, 1.442695
  %v777 = vpow.pop %v776
  %v778 = vmul.f32 %v684, 1.442695
  %v779 = vpow.pop %v778
  %v780 = vmul.f32 %v685, 1.442695
  %v781 = vpow.pop %v780
  %v782 = vmul.f32 %v686, 1.442695
  %v783 = vpow.pop %v782
  %v784 = vmul.f32 %v687, 1.442695
  %v785 = vpow.pop %v784
  %v786 = vmul.f32 %v688, 1.442695
  %v787 = vpow.pop %v786
  %v788 = vmul.f32 %v689, 1.442695
  %v789 = vpow.pop %v788
  %v790 = vmul.f32 %v690, 1.442695
  %v791 = vpow.pop %v790
  %v792 = vmul.f32 %v691, 1.442695
  %v793 = vpow.pop %v792
  %v794 = vmul.f32 %v692, 1.442695
  %v795 = vpow.pop %v794
  %v796 = vmul.f32 %v693, 1.442695
  %v797 = vpow.pop %v796
  %v798 = vmul.f32 %v694, 1.442695
  %v799 = vpow.pop %v798
  %v800 = vmul.f32 %v695, 1.442695
  %v801 = vpow.pop %v800
  %v802 = vmul.f32 %v696, 1.442695
  %v803 = vpow.pop %v802
  %v804 = vmul.f32 %v697, 1.442695
  %v805 = vpow.pop %v804
  %v806 = vmul.f32 %v698, 1.442695
  %v807 = vpow.pop %v806
  %v808 = vmul.f32 %v699, 1.442695
  %v809 = vpow.pop %v808
  %v810 = vmul.f32 %v700, 1.442695
  %v811 = vpow.pop %v810
  %v812 = vmul.f32 %v701, 1.442695
  %v813 = vpow.pop %v812
  %v814 = vmul.f32 %v702, 1.442695
  %v815 = vpow.pop %v814
  %v816 = vmul.f32 %v703, 1.442695
  %v817 = vpow.pop %v816
  %v818 = vmul.f32 %v704, 1.442695
  %v819 = vpow.pop %v818
  %v820 = vmul.f32 %v705, 1.442695
  %v821 = vpow.pop %v820
  %v822 = vmul.f32 %v706, 1.442695
  %v823 = vpow.pop %v822
  %v824 = vmul.f32 %v707, 1.442695
  %v825 = vpow.pop %v824
  %v826 = vmul.f32 %v708, 1.442695
  %v827 = vpow.pop %v826
  %v828 = vmul.f32 %v709, 1.442695
  %v829 = vpow.pop %v828
  %v830 = vmul.f32 %v710, 1.442695
  %v831 = vpow.pop %v830
  %v832 = vmul.f32 %v711, 1.442695
  %v833 = vpow.pop %v832
  %v834 = vmul.f32 %v712, 1.442695
  %v835 = vpow.pop %v834
  %v836 = vmul.f32 %v713, 1.442695
  %v837 = vpow.pop %v836
  %v838 = vmul.f32 %v714, 1.442695
  %v839 = vpow.pop %v838
  %v840 = vmul.f32 %v715, 1.442695
  %v841 = vpow.pop %v840
  %v842 = vmul.f32 %v716, 1.442695
  %v843 = vpow.pop %v842
  %v844 = vmul.f32 %v717, 1.442695
  %v845 = vpow.pop %v844
  %v846 = vadd.f32 %v719, 1.0
  %v847 = vadd.f32 %v721, 1.0
  %v848 = vadd.f32 %v723, 1.0
  %v849 = vadd.f32 %v725, 1.0
  %v850 = vadd.f32 %v727, 1.0
  %v851 = vadd.f32 %v729, 1.0
  %v852 = vadd.f32 %v731, 1.0
  %v853 = vadd.f32 %v733, 1.0
  %v854 = vadd.f32 %v735, 1.0
  %v855 = vadd.f32 %v737, 1.0
  %v856 = vadd.f32 %v739, 1.0
  %v857 = vadd.f32 %v741, 1.0
  %v858 = vadd.f32 %v743, 1.0
  %v859 = vadd.f32 %v745, 1.0
  %v860 = vadd.f32 %v747, 1.0
  %v861 = vadd.f32 %v749, 1.0
  %v862 = vadd.f32 %v751, 1.0
  %v863 = vadd.f32 %v753, 1.0
  %v864 = vadd.f32 %v755, 1.0
  %v865 = vadd.f32 %v757, 1.0
  %v866 = vadd.f32 %v759, 1.0
  %v867 = vadd.f32 %v761, 1.0
  %v868 = vadd.f32 %v763, 1.0
  %v869 = vadd.f32 %v765, 1.0
  %v870 = vadd.f32 %v767, 1.0
  %v871 = vadd.f32 %v769, 1.0
  %v872 = vadd.f32 %v771, 1.0
  %v873 = vadd.f32 %v773, 1.0
  %v874 = vadd.f32 %v775, 1.0
  %v875 = vadd.f32 %v777, 1.0
  %v876 = vadd.f32 %v779, 1.0
  %v877 = vadd.f32 %v781, 1.0
  %v878 = vadd.f32 %v783, 1.0
  %v879 = vadd.f32 %v785, 1.0
  %v880 = vadd.f32 %v787, 1.0
  %v881 = vadd.f32 %v789, 1.0
  %v882 = vadd.f32 %v791, 1.0
  %v883 = vadd.f32 %v793, 1.0
  %v884 = vadd.f32 %v795, 1.0
  %v885 = vadd.f32 %v797, 1.0
  %v886 = vadd.f32 %v799, 1.0
  %v887 = vadd.f32 %v801, 1.0
  %v888 = vadd.f32 %v803, 1.0
  %v889 = vadd.f32 %v805, 1.0
  %v890 = vadd.f32 %v807, 1.0
  %v891 = vadd.f32 %v809, 1.0
  %v892 = vadd.f32 %v811, 1.0
  %v893 = vadd.f32 %v813, 1.0
  %v894 = vadd.f32 %v815, 1.0
  %v895 = vadd.f32 %v817, 1.0
  %v896 = vadd.f32 %v819, 1.0
  %v897 = vadd.f32 %v821, 1.0
  %v898 = vadd.f32 %v823, 1.0
  %v899 = vadd.f32 %v825, 1.0
  %v900 = vadd.f32 %v827, 1.0
  %v901 = vadd.f32 %v829, 1.0
  %v902 = vadd.f32 %v831, 1.0
  %v903 = vadd.f32 %v833, 1.0
  %v904 = vadd.f32 %v835, 1.0
  %v905 = vadd.f32 %v837, 1.0
  %v906 = vadd.f32 %v839, 1.0
  %v907 = vadd.f32 %v841, 1.0
  %v908 = vadd.f32 %v843, 1.0
  %v909 = vadd.f32 %v845, 1.0
  %v910 = vrcp.pop %v846
  %v911 = vrcp.pop %v847
  %v912 = vrcp.pop %v848
  %v913 = vrcp.pop %v849
  %v914 = vrcp.pop %v850
  %v915 = vrcp.pop %v851
  %v916 = vrcp.pop %v852
  %v917 = vrcp.pop %v853
  %v918 = vrcp.pop %v854
  %v919 = vrcp.pop %v855
  %v920 = vrcp.pop %v856
  %v921 = vrcp.pop %v857
  %v922 = vrcp.pop %v858
  %v923 = vrcp.pop %v859
  %v924 = vrcp.pop %v860
  %v925 = vrcp.pop %v861
  %v926 = vrcp.pop %v862
  %v927 = vrcp.pop %v863
  %v928 = vrcp.pop %v864
  %v929 = vrcp.pop %v865
  %v930 = vrcp.pop %v866
  %v931 = vrcp.pop %v867
  %v932 = vrcp.pop %v868
  %v933 = vrcp.pop %v869
  %v934 = vrcp.pop %v870
  %v935 = vrcp.pop %v871
  %v936 = vrcp.pop %v872
  %v937 = vrcp.pop %v873
  %v938 = vrcp.pop %v874
  %v939 = vrcp.pop %v875
  %v940 = vrcp.pop %v876
  %v941 = vrcp.pop %v877
  %v942 = vrcp.pop %v878
  %v943 = vrcp.pop %v879
  %v944 = vrcp.pop %v880
  %v945 = vrcp.pop %v881
  %v946 = vrcp.pop %v882
  %v947 = vrcp.pop %v883
  %v948 = vrcp.pop %v884
  %v949 = vrcp.pop %v885
  %v950 = vrcp.pop %v886
  %v951 = vrcp.pop %v887
  %v952 = vrcp.pop %v888
  %v953 = vrcp.pop %v889
  %v954 = vrcp.pop %v890
  %v955 = vrcp.pop %v891
  %v956 = vrcp.pop %v892
  %v957 = vrcp.pop %v893
  %v958 = vrcp.pop %v894
  %v959 = vrcp.pop %v895
  %v960 = vrcp.pop %v896
  %v961 = vrcp.pop %v897
  %v962 = vrcp.pop %v898
  %v963 = vrcp.pop %v899
  %v964 = vrcp.pop %v900
  %v965 = vrcp.pop %v901
  %v966 = vrcp.pop %v902
  %v967 = vrcp.pop %v903
  %v968 = vrcp.pop %v904
  %v969 = vrcp.pop %v905
  %v970 = vrcp.pop %v906
  %v971 = vrcp.pop %v907
  %v972 = vrcp.pop %v908
  %v973 = vrcp.pop %v909
  %v974 = vmul.f32 %v400, %v910
  %v975 = vmul.f32 %v403, %v911
  %v976 = vmul.f32 %v408, %v912
  %v977 = vmul.f32 %v411, %v913
  %v978 = vmul.f32 %v416, %v914
  %v979 = vmul.f32 %v419, %v915
  %v980 = vmul.f32 %v424, %v916
  %v981 = vmul.f32 %v427, %v917
  %v982 = vmul.f32 %v432, %v918
  %v983 = vmul.f32 %v435, %v919
  %v984 = vmul.f32 %v440, %v920
  %v985 = vmul.f32 %v443, %v921
  %v986 = vmul.f32 %v448, %v922
  %v987 = vmul.f32 %v451, %v923
  %v988 = vmul.f32 %v456, %v924
  %v989 = vmul.f32 %v459, %v925
  %v990 = vmul.f32 %v464, %v926
  %v991 = vmul.f32 %v467, %v927
  %v992 = vmul.f32 %v472, %v928
  %v993 = vmul.f32 %v475, %v929
  %v994 = vmul.f32 %v480, %v930
  %v995 = vmul.f32 %v483, %v931
  %v996 = vmul.f32 %v488, %v932
  %v997 = vmul.f32 %v491, %v933
  %v998 = vmul.f32 %v496, %v934
  %v999 = vmul.f32 %v499, %v935
  %v1000 = vmul.f32 %v504, %v936
  %v1001 = vmul.f32 %v507, %v937
  %v1002 = vmul.f32 %v512, %v938
  %v1003 = vmul.f32 %v515, %v939
  %v1004 = vmul.f32 %v520, %v940
  %v1005 = vmul.f32 %v523, %v941
  %v1006 = vmul.f32 %v528, %v942
  %v1007 = vmul.f32 %v531, %v943
  %v1008 = vmul.f32 %v536, %v944
  %v1009 = vmul.f32 %v539, %v945
  %v1010 = vmul.f32 %v544, %v946
  %v1011 = vmul.f32 %v547, %v947
  %v1012 = vmul.f32 %v552, %v948
  %v1013 = vmul.f32 %v555, %v949
  %v1014 = vmul.f32 %v560, %v950
  %v1015 = vmul.f32 %v563, %v951
  %v1016 = vmul.f32 %v568, %v952
  %v1017 = vmul.f32 %v571, %v953
  %v1018 = vmul.f32 %v576, %v954
  %v1019 = vmul.f32 %v579, %v955
  %v1020 = vmul.f32 %v584, %v956
  %v1021 = vmul.f32 %v587, %v957
  %v1022 = vmul.f32 %v592, %v958
  %v1023 = vmul.f32 %v595, %v959
  %v1024 = vmul.f32 %v600, %v960
  %v1025 = vmul.f32 %v603, %v961
  %v1026 = vmul.f32 %v608, %v962
  %v1027 = vmul.f32 %v611, %v963
  %v1028 = vmul.f32 %v616, %v964
  %v1029 = vmul.f32 %v619, %v965
  %v1030 = vmul.f32 %v624, %v966
  %v1031 = vmul.f32 %v627, %v967
  %v1032 = vmul.f32 %v632, %v968
  %v1033 = vmul.f32 %v635, %v969
  %v1034 = vmul.f32 %v640, %v970
  %v1035 = vmul.f32 %v643, %v971
  %v1036 = vmul.f32 %v648, %v972
  %v1037 = vmul.f32 %v651, %v973
  %v1038 = vpack.c.bf16 %v975, %v974
  %v1039 = vpack.c.bf16 %v977, %v976
  %v1040 = vpack.c.bf16 %v979, %v978
  %v1041 = vpack.c.bf16 %v981, %v980
  %v1042 = vpack.c.bf16 %v983, %v982
  %v1043 = vpack.c.bf16 %v985, %v984
  %v1044 = vpack.c.bf16 %v987, %v986
  %v1045 = vpack.c.bf16 %v989, %v988
  %v1046 = vpack.c.bf16 %v991, %v990
  %v1047 = vpack.c.bf16 %v993, %v992
  %v1048 = vpack.c.bf16 %v995, %v994
  %v1049 = vpack.c.bf16 %v997, %v996
  %v1050 = vpack.c.bf16 %v999, %v998
  %v1051 = vpack.c.bf16 %v1001, %v1000
  %v1052 = vpack.c.bf16 %v1003, %v1002
  %v1053 = vpack.c.bf16 %v1005, %v1004
  %v1054 = vpack.c.bf16 %v1007, %v1006
  %v1055 = vpack.c.bf16 %v1009, %v1008
  %v1056 = vpack.c.bf16 %v1011, %v1010
  %v1057 = vpack.c.bf16 %v1013, %v1012
  %v1058 = vpack.c.bf16 %v1015, %v1014
  %v1059 = vpack.c.bf16 %v1017, %v1016
  %v1060 = vpack.c.bf16 %v1019, %v1018
  %v1061 = vpack.c.bf16 %v1021, %v1020
  %v1062 = vpack.c.bf16 %v1023, %v1022
  %v1063 = vpack.c.bf16 %v1025, %v1024
  %v1064 = vpack.c.bf16 %v1027, %v1026
  %v1065 = vpack.c.bf16 %v1029, %v1028
  %v1066 = vpack.c.bf16 %v1031, %v1030
  %v1067 = vpack.c.bf16 %v1033, %v1032
  %v1068 = vpack.c.bf16 %v1035, %v1034
  %v1069 = vpack.c.bf16 %v1037, %v1036
  %v1102 = vunpack.c.l.b16 %v1038
  %v1103 = vunpack.c.h.b16 %v1038
  %v1104 = vunpack.c.l.b16 %v1039
  %v1105 = vunpack.c.h.b16 %v1039
  %v1106 = vunpack.c.l.b16 %v1040
  %v1107 = vunpack.c.h.b16 %v1040
  %v1108 = vunpack.c.l.b16 %v1041
  %v1109 = vunpack.c.h.b16 %v1041
  %v1110 = vunpack.c.l.b16 %v1042
  %v1111 = vunpack.c.h.b16 %v1042
  %v1112 = vunpack.c.l.b16 %v1043
  %v1113 = vunpack.c.h.b16 %v1043
  %v1114 = vunpack.c.l.b16 %v1044
  %v1115 = vunpack.c.h.b16 %v1044
  %v1116 = vunpack.c.l.b16 %v1045
  %v1117 = vunpack.c.h.b16 %v1045
  %v1118 = vunpack.c.l.b16 %v1046
  %v1119 = vunpack.c.h.b16 %v1046
  %v1120 = vunpack.c.l.b16 %v1047
  %v1121 = vunpack.c.h.b16 %v1047
  %v1122 = vunpack.c.l.b16 %v1048
  %v1123 = vunpack.c.h.b16 %v1048
  %v1124 = vunpack.c.l.b16 %v1049
  %v1125 = vunpack.c.h.b16 %v1049
  %v1126 = vunpack.c.l.b16 %v1050
  %v1127 = vunpack.c.h.b16 %v1050
  %v1128 = vunpack.c.l.b16 %v1051
  %v1129 = vunpack.c.h.b16 %v1051
  %v1130 = vunpack.c.l.b16 %v1052
  %v1131 = vunpack.c.h.b16 %v1052
  %v1132 = vunpack.c.l.b16 %v1053
  %v1133 = vunpack.c.h.b16 %v1053
  %v1134 = vunpack.c.l.b16 %v1054
  %v1135 = vunpack.c.h.b16 %v1054
  %v1136 = vunpack.c.l.b16 %v1055
  %v1137 = vunpack.c.h.b16 %v1055
  %v1138 = vunpack.c.l.b16 %v1056
  %v1139 = vunpack.c.h.b16 %v1056
  %v1140 = vunpack.c.l.b16 %v1057
  %v1141 = vunpack.c.h.b16 %v1057
  %v1142 = vunpack.c.l.b16 %v1058
  %v1143 = vunpack.c.h.b16 %v1058
  %v1144 = vunpack.c.l.b16 %v1059
  %v1145 = vunpack.c.h.b16 %v1059
  %v1146 = vunpack.c.l.b16 %v1060
  %v1147 = vunpack.c.h.b16 %v1060
  %v1148 = vunpack.c.l.b16 %v1061
  %v1149 = vunpack.c.h.b16 %v1061
  %v1150 = vunpack.c.l.b16 %v1062
  %v1151 = vunpack.c.h.b16 %v1062
  %v1152 = vunpack.c.l.b16 %v1063
  %v1153 = vunpack.c.h.b16 %v1063
  %v1154 = vunpack.c.l.b16 %v1064
  %v1155 = vunpack.c.h.b16 %v1064
  %v1156 = vunpack.c.l.b16 %v1065
  %v1157 = vunpack.c.h.b16 %v1065
  %v1158 = vunpack.c.l.b16 %v1066
  %v1159 = vunpack.c.h.b16 %v1066
  %v1160 = vunpack.c.l.b16 %v1067
  %v1161 = vunpack.c.h.b16 %v1067
  %v1162 = vunpack.c.l.b16 %v1068
  %v1163 = vunpack.c.h.b16 %v1068
  %v1164 = vunpack.c.l.b16 %v1069
  %v1165 = vunpack.c.h.b16 %v1069
  %v1166 = vpack.c.b16 %v1102, %v1102
  %v1167 = vpack.c.b16 %v1103, %v1103
  %v1168 = vpack.c.b16 %v1104, %v1104
  %v1169 = vpack.c.b16 %v1105, %v1105
  %v1170 = vpack.c.b16 %v1106, %v1106
  %v1171 = vpack.c.b16 %v1107, %v1107
  %v1172 = vpack.c.b16 %v1108, %v1108
  %v1173 = vpack.c.b16 %v1109, %v1109
  %v1174 = vpack.c.b16 %v1110, %v1110
  %v1175 = vpack.c.b16 %v1111, %v1111
  %v1176 = vpack.c.b16 %v1112, %v1112
  %v1177 = vpack.c.b16 %v1113, %v1113
  %v1178 = vpack.c.b16 %v1114, %v1114
  %v1179 = vpack.c.b16 %v1115, %v1115
  %v1180 = vpack.c.b16 %v1116, %v1116
  %v1181 = vpack.c.b16 %v1117, %v1117
  %v1182 = vpack.c.b16 %v1118, %v1118
  %v1183 = vpack.c.b16 %v1119, %v1119
  %v1184 = vpack.c.b16 %v1120, %v1120
  %v1185 = vpack.c.b16 %v1121, %v1121
  %v1186 = vpack.c.b16 %v1122, %v1122
  %v1187 = vpack.c.b16 %v1123, %v1123
  %v1188 = vpack.c.b16 %v1124, %v1124
  %v1189 = vpack.c.b16 %v1125, %v1125
  %v1190 = vpack.c.b16 %v1126, %v1126
  %v1191 = vpack.c.b16 %v1127, %v1127
  %v1192 = vpack.c.b16 %v1128, %v1128
  %v1193 = vpack.c.b16 %v1129, %v1129
  %v1194 = vpack.c.b16 %v1130, %v1130
  %v1195 = vpack.c.b16 %v1131, %v1131
  %v1196 = vpack.c.b16 %v1132, %v1132
  %v1197 = vpack.c.b16 %v1133, %v1133
  %v1198 = vpack.c.b16 %v1134, %v1134
  %v1199 = vpack.c.b16 %v1135, %v1135
  %v1200 = vpack.c.b16 %v1136, %v1136
  %v1201 = vpack.c.b16 %v1137, %v1137
  %v1202 = vpack.c.b16 %v1138, %v1138
  %v1203 = vpack.c.b16 %v1139, %v1139
  %v1204 = vpack.c.b16 %v1140, %v1140
  %v1205 = vpack.c.b16 %v1141, %v1141
  %v1206 = vpack.c.b16 %v1142, %v1142
  %v1207 = vpack.c.b16 %v1143, %v1143
  %v1208 = vpack.c.b16 %v1144, %v1144
  %v1209 = vpack.c.b16 %v1145, %v1145
  %v1210 = vpack.c.b16 %v1146, %v1146
  %v1211 = vpack.c.b16 %v1147, %v1147
  %v1212 = vpack.c.b16 %v1148, %v1148
  %v1213 = vpack.c.b16 %v1149, %v1149
  %v1214 = vpack.c.b16 %v1150, %v1150
  %v1215 = vpack.c.b16 %v1151, %v1151
  %v1216 = vpack.c.b16 %v1152, %v1152
  %v1217 = vpack.c.b16 %v1153, %v1153
  %v1218 = vpack.c.b16 %v1154, %v1154
  %v1219 = vpack.c.b16 %v1155, %v1155
  %v1220 = vpack.c.b16 %v1156, %v1156
  %v1221 = vpack.c.b16 %v1157, %v1157
  %v1222 = vpack.c.b16 %v1158, %v1158
  %v1223 = vpack.c.b16 %v1159, %v1159
  %v1224 = vpack.c.b16 %v1160, %v1160
  %v1225 = vpack.c.b16 %v1161, %v1161
  %v1226 = vpack.c.b16 %v1162, %v1162
  %v1227 = vpack.c.b16 %v1163, %v1163
  %v1228 = vpack.c.b16 %v1164, %v1164
  %v1229 = vpack.c.b16 %v1165, %v1165
  %vm1294 = vcmask 257024
  %1295 = vst.msk [vmem:[%s3] sm:$0xf] %vm1294, %v1166
  %1296 = vst.msk [vmem:[%s3 + $0x4] sm:$0xf] %vm1294, %v1167
  %1297 = vst.msk [vmem:[%s3 + $0x8] sm:$0xf] %vm1294, %v1168
  %1298 = vst.msk [vmem:[%s3 + $0xc] sm:$0xf] %vm1294, %v1169
  %1299 = vst.msk [vmem:[%s3 + $0x10] sm:$0xf] %vm1294, %v1170
  %1300 = vst.msk [vmem:[%s3 + $0x14] sm:$0xf] %vm1294, %v1171
  %1301 = vst.msk [vmem:[%s3 + $0x18] sm:$0xf] %vm1294, %v1172
  %1302 = vst.msk [vmem:[%s3 + $0x1c] sm:$0xf] %vm1294, %v1173
  %1303 = vst.msk [vmem:[%s3 + $0x20] sm:$0xf] %vm1294, %v1174
  %1304 = vst.msk [vmem:[%s3 + $0x24] sm:$0xf] %vm1294, %v1175
  %1305 = vst.msk [vmem:[%s3 + $0x28] sm:$0xf] %vm1294, %v1176
  %1306 = vst.msk [vmem:[%s3 + $0x2c] sm:$0xf] %vm1294, %v1177
  %1307 = vst.msk [vmem:[%s3 + $0x30] sm:$0xf] %vm1294, %v1178
  %1308 = vst.msk [vmem:[%s3 + $0x34] sm:$0xf] %vm1294, %v1179
  %1309 = vst.msk [vmem:[%s3 + $0x38] sm:$0xf] %vm1294, %v1180
  %1310 = vst.msk [vmem:[%s3 + $0x3c] sm:$0xf] %vm1294, %v1181
  %1311 = vst.msk [vmem:[%s3 + $0x40] sm:$0xf] %vm1294, %v1182
  %1312 = vst.msk [vmem:[%s3 + $0x44] sm:$0xf] %vm1294, %v1183
  %1313 = vst.msk [vmem:[%s3 + $0x48] sm:$0xf] %vm1294, %v1184
  %1314 = vst.msk [vmem:[%s3 + $0x4c] sm:$0xf] %vm1294, %v1185
  %1315 = vst.msk [vmem:[%s3 + $0x50] sm:$0xf] %vm1294, %v1186
  %1316 = vst.msk [vmem:[%s3 + $0x54] sm:$0xf] %vm1294, %v1187
  %1317 = vst.msk [vmem:[%s3 + $0x58] sm:$0xf] %vm1294, %v1188
  %1318 = vst.msk [vmem:[%s3 + $0x5c] sm:$0xf] %vm1294, %v1189
  %1319 = vst.msk [vmem:[%s3 + $0x60] sm:$0xf] %vm1294, %v1190
  %1320 = vst.msk [vmem:[%s3 + $0x64] sm:$0xf] %vm1294, %v1191
  %1321 = vst.msk [vmem:[%s3 + $0x68] sm:$0xf] %vm1294, %v1192
  %1322 = vst.msk [vmem:[%s3 + $0x6c] sm:$0xf] %vm1294, %v1193
  %1323 = vst.msk [vmem:[%s3 + $0x70] sm:$0xf] %vm1294, %v1194
  %1324 = vst.msk [vmem:[%s3 + $0x74] sm:$0xf] %vm1294, %v1195
  %1325 = vst.msk [vmem:[%s3 + $0x78] sm:$0xf] %vm1294, %v1196
  %1326 = vst.msk [vmem:[%s3 + $0x7c] sm:$0xf] %vm1294, %v1197
  %1327 = vst.msk [vmem:[%s3 + $0x80] sm:$0xf] %vm1294, %v1198
  %1328 = vst.msk [vmem:[%s3 + $0x84] sm:$0xf] %vm1294, %v1199
  %1329 = vst.msk [vmem:[%s3 + $0x88] sm:$0xf] %vm1294, %v1200
  %1330 = vst.msk [vmem:[%s3 + $0x8c] sm:$0xf] %vm1294, %v1201
  %1331 = vst.msk [vmem:[%s3 + $0x90] sm:$0xf] %vm1294, %v1202
  %1332 = vst.msk [vmem:[%s3 + $0x94] sm:$0xf] %vm1294, %v1203
  %1333 = vst.msk [vmem:[%s3 + $0x98] sm:$0xf] %vm1294, %v1204
  %1334 = vst.msk [vmem:[%s3 + $0x9c] sm:$0xf] %vm1294, %v1205
  %1335 = vst.msk [vmem:[%s3 + $0xa0] sm:$0xf] %vm1294, %v1206
  %1336 = vst.msk [vmem:[%s3 + $0xa4] sm:$0xf] %vm1294, %v1207
  %1337 = vst.msk [vmem:[%s3 + $0xa8] sm:$0xf] %vm1294, %v1208
  %1338 = vst.msk [vmem:[%s3 + $0xac] sm:$0xf] %vm1294, %v1209
  %1339 = vst.msk [vmem:[%s3 + $0xb0] sm:$0xf] %vm1294, %v1210
  %1340 = vst.msk [vmem:[%s3 + $0xb4] sm:$0xf] %vm1294, %v1211
  %1341 = vst.msk [vmem:[%s3 + $0xb8] sm:$0xf] %vm1294, %v1212
  %1342 = vst.msk [vmem:[%s3 + $0xbc] sm:$0xf] %vm1294, %v1213
  %1343 = vst.msk [vmem:[%s3 + $0xc0] sm:$0xf] %vm1294, %v1214
  %1344 = vst.msk [vmem:[%s3 + $0xc4] sm:$0xf] %vm1294, %v1215
  %1345 = vst.msk [vmem:[%s3 + $0xc8] sm:$0xf] %vm1294, %v1216
  %1346 = vst.msk [vmem:[%s3 + $0xcc] sm:$0xf] %vm1294, %v1217
  %1347 = vst.msk [vmem:[%s3 + $0xd0] sm:$0xf] %vm1294, %v1218
  %1348 = vst.msk [vmem:[%s3 + $0xd4] sm:$0xf] %vm1294, %v1219
  %1349 = vst.msk [vmem:[%s3 + $0xd8] sm:$0xf] %vm1294, %v1220
  %1350 = vst.msk [vmem:[%s3 + $0xdc] sm:$0xf] %vm1294, %v1221
  %1351 = vst.msk [vmem:[%s3 + $0xe0] sm:$0xf] %vm1294, %v1222
  %1352 = vst.msk [vmem:[%s3 + $0xe4] sm:$0xf] %vm1294, %v1223
  %1353 = vst.msk [vmem:[%s3 + $0xe8] sm:$0xf] %vm1294, %v1224
  %1354 = vst.msk [vmem:[%s3 + $0xec] sm:$0xf] %vm1294, %v1225
  %1355 = vst.msk [vmem:[%s3 + $0xf0] sm:$0xf] %vm1294, %v1226
  %1356 = vst.msk [vmem:[%s3 + $0xf4] sm:$0xf] %vm1294, %v1227
  %1357 = vst.msk [vmem:[%s3 + $0xf8] sm:$0xf] %vm1294, %v1228
  %1358 = vst.msk [vmem:[%s3 + $0xfc] sm:$0xf] %vm1294, %v1229
  // Predicated region
  $region14: #{tpu_custom_call.1} parent=0 // pred_check
    _
  $region15: #{tpu_custom_call.1} parent=0 // pred_check_branch
    %1360 = sbr.rel (0) target = $region17
  $region16: #{tpu_custom_call.1} parent=0 // pred_region
    _
  $region17: #{tpu_custom_call.1} parent=0 // pred_fallthru
    _
  // Predicated region
  $region18: #{tpu_custom_call.1} parent=0 // pred_check
    _
  $region19: #{tpu_custom_call.1} parent=0 // pred_check_branch
    %1362 = sbr.rel (0) target = $region21
  $region20: #{tpu_custom_call.1} parent=0 // pred_region
    _
  $region21: #{tpu_custom_call.1} parent=0 // pred_fallthru
    _

</llo_original>
